<compile_context>
chip_gen: v5e
topology: v5e:2x2
jax: 0.10.0
libtpu: 0.0.40
codegen_flags: <defaults>
</compile_context>

<pallas_src>
import functools

import jax
import jax.numpy as jnp
from jax import lax
from jax.experimental import pallas as pl
from jax.experimental.pallas import tpu as pltpu

ALPHA = 0.25
GAMMA = 2.0
LANE = 128
SUBLANE = 8
CHUNK_ROWS = 256   # rows per in-kernel accumulation chunk (bounds vreg live ranges)


def _round_up(x, k):
    return ((x + k - 1) // k) * k


def _bce_partial_kernel(p_ref, l_ref, o_ref, *, bm, nblocks, chunk,
                        m_valid, needs_mask, hard_labels):
    """Accumulate per-(sublane, lane) partial sums of the element-wise BCE.

    The (8, 128) output block stays resident across the inner ("arbitrary")
    grid axis and acts as the accumulator; one distinct block per outer
    ("parallel") split, so megacore splitting on v7x is race-free.
    """
    c = pl.program_id(0)
    i = pl.program_id(1)

    @pl.when(i == 0)
    def _():
        o_ref[...] = jnp.zeros_like(o_ref)

    # Intended first slab-row of this block (independent of index_map clamping).
    row0 = (c * nblocks + i) * bm

    def chunk_sum(s):
        r = pl.multiple_of(s * chunk, chunk)
        p = p_ref[pl.ds(r, chunk), :].astype(jnp.float32)
        y = l_ref[pl.ds(r, chunk), :].astype(jnp.float32)

        if hard_labels:
            # Single-log fast path (exact only for hard {0,1} labels): halves EUP work.
            p_t = jnp.where(y >= 0.5, p, 1.0 - p)
            bce = -jnp.maximum(jnp.log(p_t), -100.0)
        else:
            # nn.BCELoss element-wise term with PyTorch's -100 log clamp;
            # exact for soft labels as well.
            log_p = jnp.maximum(jnp.log(p), -100.0)
            log_1mp = jnp.maximum(jnp.log(1.0 - p), -100.0)
            bce = -(y * log_p + (1.0 - y) * log_1mp)

        if needs_mask:
            # Ragged tail handled in-kernel: rows past the real slab hold garbage
            # (possibly NaN after log), so SELECT them away — never multiply by 0.
            row_idx = lax.broadcasted_iota(jnp.int32, (chunk, LANE), 0)
            valid = (row0 + r + row_idx) < m_valid
            bce = jnp.where(valid, bce, 0.0)

        # Sublane-group reduction only (pure VPU adds, hidden under the DMA stream);
        # the single cross-lane reduction is paid once, outside the kernel.
        return jnp.sum(bce.reshape(chunk // SUBLANE, SUBLANE, LANE), axis=0)

    n_chunks = bm // chunk
    if n_chunks == 1:
        o_ref[...] += chunk_sum(0)
    else:
        acc = lax.fori_loop(0, n_chunks, lambda s, a: a + chunk_sum(s),
                            jnp.zeros((SUBLANE, LANE), jnp.float32))
        o_ref[...] += acc


def _choose_bm(m0, n_splits, block_rows):
    need = max(SUBLANE, pl.cdiv(m0, n_splits))
    if need <= CHUNK_ROWS:
        return _round_up(need, SUBLANE)
    return min(_round_up(block_rows, CHUNK_ROWS), _round_up(need, CHUNK_ROWS))


def _plan(m0, n_splits, block_rows):
    """Pick (n_splits, bm, nblocks); drop the split if the last core gets no real rows."""
    n_splits = max(1, int(n_splits))
    while n_splits > 1:
        bm = _choose_bm(m0, n_splits, block_rows)
        nblocks = pl.cdiv(m0, n_splits * bm)
        if (n_splits - 1) * nblocks * bm < m0:
            return n_splits, bm, nblocks
        n_splits -= 1
    bm = _choose_bm(m0, 1, block_rows)
    return 1, bm, pl.cdiv(m0, bm)


def _default_n_splits():
    # n_splits=2 only pays on v7x (2 TensorCores/chip); 1 elsewhere.
    try:
        kind = jax.devices()[0].device_kind.lower()
    except Exception:
        return 1
    return 2 if "v7" in kind else 1


def focal_loss(preds, labels, alpha=ALPHA, gamma=GAMMA,
               block_rows=4096, n_splits=None, hard_labels=False):
    # TODO(synk): the ignore_index branch of the PyTorch module is buggy/unused
    # (it references self.ignore); only the ignore_index=None path is implemented.
    # TODO(synk): a BCE-with-logits variant would remove the upstream sigmoid HBM pass,
    # but the module's API takes probabilities, so it is not changed here.
    assert preds.shape == labels.shape
    total_n = preds.size
    assert total_n > 0

    if n_splits is None:
        n_splits = _default_n_splits()

    # Flatten (pure metadata reshape).  No host-side astype: tensors stream in their
    # native dtype (bf16/int8 labels cut HBM bytes) and are cast in-VMEM by the kernel.
    p_flat = preds.reshape(-1)
    l_flat = labels.reshape(-1)

    # Only when the element count is not lane-aligned do we pay one small pad pass;
    # the (p=0, y=0) padding contributes exactly 0 to the BCE sum on both paths.
    if total_n % LANE:
        pad = LANE - total_n % LANE
        p_flat = jnp.pad(p_flat, (0, pad))
        l_flat = jnp.pad(l_flat, (0, pad))

    m0 = p_flat.size // LANE                    # rows of the lane-dense (m0, 128) slab
    p2 = p_flat.reshape(m0, LANE)               # bitcast-style reshape, no extra pass
    l2 = l_flat.reshape(m0, LANE)

    n_splits, bm, nblocks = _plan(m0, n_splits, block_rows)
    chunk = min(CHUNK_ROWS, bm)
    needs_mask = (n_splits * nblocks * bm) != m0
    last_block = max(0, pl.cdiv(m0, bm) - 1)

    def in_index_map(c, i):
        # Clamp so a (fully masked-out) trailing block never indexes past the slab.
        return (jnp.minimum(c * nblocks + i, last_block), 0)

    kernel = functools.partial(
        _bce_partial_kernel, bm=bm, nblocks=nblocks, chunk=chunk,
        m_valid=m0, needs_mask=needs_mask, hard_labels=hard_labels)

    n_elems = n_splits * nblocks * bm * LANE
    cost = pl.CostEstimate(
        flops=(5 if hard_labels else 8) * n_elems,
        transcendentals=(1 if hard_labels else 2) * n_elems,
        bytes_accessed=m0 * LANE * (p2.dtype.itemsize + l2.dtype.itemsize)
        + n_splits * SUBLANE * LANE * 4,
    )

    partials = pl.pallas_call(
        kernel,
        out_shape=jax.ShapeDtypeStruct((n_splits * SUBLANE, LANE), jnp.float32),
        grid_spec=pltpu.PrefetchScalarGridSpec(
            num_scalar_prefetch=0,
            grid=(n_splits, nblocks),
            in_specs=[
                pl.BlockSpec((bm, LANE), in_index_map),
                pl.BlockSpec((bm, LANE), in_index_map),
            ],
            out_specs=pl.BlockSpec((SUBLANE, LANE), lambda c, i: (c, 0)),
        ),
        compiler_params=pltpu.CompilerParams(
            dimension_semantics=("parallel", "arbitrary"),
            vmem_limit_bytes=32 * 1024 * 1024,   # bm=4096: ~8 MiB double-buffered inputs
        ),
        cost_estimate=cost,
    )(p2, l2)

    # Tiny scalar epilogue (a handful of flops) in plain JAX.
    mean_bce = jnp.sum(partials) / jnp.float32(total_n)
    logpt = -mean_bce
    pt = jnp.exp(logpt)
    one_minus_pt = 1.0 - pt
    if float(gamma) == 2.0:
        mod = one_minus_pt * one_minus_pt      # avoid pow -> exp/log pair
    else:
        mod = one_minus_pt ** gamma
    return -mod * alpha * logpt


def focal_loss_ref(preds, labels, alpha=ALPHA, gamma=GAMMA):
    p = preds.astype(jnp.float32)
    y = labels.astype(jnp.float32)
    log_p = jnp.maximum(jnp.log(p), -100.0)
    log_1mp = jnp.maximum(jnp.log(1.0 - p), -100.0)
    bce = jnp.mean(-(y * log_p + (1.0 - y) * log_1mp))
    logpt = -bce
    pt = jnp.exp(logpt)
    return -((1.0 - pt) ** gamma) * alpha * logpt


if __name__ == "__main__":
    key = jax.random.PRNGKey(0)
    k1, k2 = jax.random.split(key)
    # preds are probabilities (output of a sigmoid), labels are binary targets.
    x_shape = (2, 4, 16, 16)
    preds = jax.nn.sigmoid(jax.random.normal(k1, x_shape, dtype=jnp.float32))
    labels = jax.random.bernoulli(k2, 0.5, x_shape).astype(jnp.float32)

    out = focal_loss(preds, labels)
    out = jax.block_until_ready(out)

    ref = focal_loss_ref(preds, labels)
    assert jnp.allclose(out, ref, rtol=1e-5, atol=1e-6), (out, ref)

    print("KERNEL_OK")
</pallas_src>

<mosaic_0001>
module attributes {stable_mosaic.version = 11 : i64} {
  func.func @_bce_partial_kernel(%arg0: i32, %arg1: i32, %arg2: memref<16x128xf32, #tpu.memory_space<vmem>>, %arg3: memref<16x128xf32, #tpu.memory_space<vmem>>, %arg4: memref<8x128xf32, #tpu.memory_space<vmem>>) attributes {dimension_semantics = [#tpu.dimension_semantics<parallel>, #tpu.dimension_semantics<arbitrary>], iteration_bounds = array<i64: 1, 1>, scalar_prefetch = 0 : i64, scratch_operands = 0 : i64, tpu.core_type = #tpu.core_type<tc>, window_params = [{transform_indices = @transform_0, window_bounds = array<i64: 16, 128>}, {transform_indices = @transform_1, window_bounds = array<i64: 16, 128>}, {transform_indices = @transform_2, window_bounds = array<i64: 8, 128>}]} {
    %c0_i32 = arith.constant 0 : i32
    %0 = arith.cmpi eq, %arg1, %c0_i32 : i32
    %1 = arith.extui %0 : i1 to i32
    %c0_i32_0 = arith.constant 0 : i32
    %2 = arith.cmpi ne, %1, %c0_i32_0 : i32
    scf.if %2 {
      %cst_12 = arith.constant 0.000000e+00 : f32
      %28 = vector.broadcast %cst_12 : f32 to vector<8x128xf32>
      %c0_13 = arith.constant 0 : index
      %c0_14 = arith.constant 0 : index
      %29 = vector.load %arg4[%c0_13, %c0_14] : memref<8x128xf32, #tpu.memory_space<vmem>>, vector<8x128xf32>
      tpu.vector_store %arg4[%c0_13, %c0_14], %28 {strides = array<i32>} : memref<8x128xf32, #tpu.memory_space<vmem>>, vector<8x128xf32>,
    } else {
    }
    %c0 = arith.constant 0 : index
    %c0_1 = arith.constant 0 : index
    %3 = vector.load %arg4[%c0, %c0_1] : memref<8x128xf32, #tpu.memory_space<vmem>>, vector<8x128xf32>
    %c0_i32_2 = arith.constant 0 : i32
    %4 = tpu.assume_multiple %c0_i32_2, 16 : i32
    %5 = arith.index_cast %4 : i32 to index
    %c0_3 = arith.constant 0 : index
    %6 = vector.load %arg2[%5, %c0_3] : memref<16x128xf32, #tpu.memory_space<vmem>>, vector<16x128xf32>
    %7 = arith.index_cast %4 : i32 to index
    %c0_4 = arith.constant 0 : index
    %8 = vector.load %arg3[%7, %c0_4] : memref<16x128xf32, #tpu.memory_space<vmem>>, vector<16x128xf32>
    %9 = math.log %6 : vector<16x128xf32>
    %cst = arith.constant -1.000000e+02 : f32
    %10 = vector.broadcast %cst : f32 to vector<16x128xf32>
    %11 = arith.maximumf %9, %10 : vector<16x128xf32>
    %cst_5 = arith.constant 1.000000e+00 : f32
    %12 = vector.broadcast %cst_5 : f32 to vector<16x128xf32>
    %13 = arith.subf %12, %6 : vector<16x128xf32>
    %14 = math.log %13 : vector<16x128xf32>
    %cst_6 = arith.constant -1.000000e+02 : f32
    %15 = vector.broadcast %cst_6 : f32 to vector<16x128xf32>
    %16 = arith.maximumf %14, %15 : vector<16x128xf32>
    %17 = arith.mulf %8, %11 : vector<16x128xf32>
    %cst_7 = arith.constant 1.000000e+00 : f32
    %18 = vector.broadcast %cst_7 : f32 to vector<16x128xf32>
    %19 = arith.subf %18, %8 : vector<16x128xf32>
    %20 = arith.mulf %19, %16 : vector<16x128xf32>
    %21 = arith.addf %17, %20 : vector<16x128xf32>
    %cst_8 = arith.constant 0.000000e+00 : f32
    %22 = vector.broadcast %cst_8 : f32 to vector<16x128xf32>
    %23 = arith.subf %22, %21 : vector<16x128xf32>
    %24 = vector.shape_cast %23 : vector<16x128xf32> to vector<2x8x128xf32>
    %cst_9 = arith.constant dense<0.000000e+00> : vector<8x128xf32>
    %25 = vector.multi_reduction <add>, %24, %cst_9 [0] : vector<2x8x128xf32> to vector<8x128xf32>
    %26 = arith.addf %3, %25 : vector<8x128xf32>
    %c0_10 = arith.constant 0 : index
    %c0_11 = arith.constant 0 : index
    %27 = vector.load %arg4[%c0_10, %c0_11] : memref<8x128xf32, #tpu.memory_space<vmem>>, vector<8x128xf32>
    tpu.vector_store %arg4[%c0_10, %c0_11], %26 {strides = array<i32>} : memref<8x128xf32, #tpu.memory_space<vmem>>, vector<8x128xf32>,
    return
  }
  func.func @transform_0(%arg0: i32, %arg1: i32) -> (i32, i32) {
    %c1_i32 = arith.constant 1 : i32
    %0 = arith.muli %arg0, %c1_i32 : i32
    %1 = arith.addi %0, %arg1 : i32
    %c0_i32 = arith.constant 0 : i32
    %2 = arith.minsi %1, %c0_i32 : i32
    %c0_i32_0 = arith.constant 0 : i32
    %c0_i32_1 = arith.constant 0 : i32
    return %2, %c0_i32_0 : i32, i32
  }
  func.func @transform_1(%arg0: i32, %arg1: i32) -> (i32, i32) {
    %c1_i32 = arith.constant 1 : i32
    %0 = arith.muli %arg0, %c1_i32 : i32
    %1 = arith.addi %0, %arg1 : i32
    %c0_i32 = arith.constant 0 : i32
    %2 = arith.minsi %1, %c0_i32 : i32
    %c0_i32_0 = arith.constant 0 : i32
    %c0_i32_1 = arith.constant 0 : i32
    return %2, %c0_i32_0 : i32, i32
  }
  func.func @transform_2(%arg0: i32, %arg1: i32) -> (i32, i32) {
    %c0_i32 = arith.constant 0 : i32
    %c0_i32_0 = arith.constant 0 : i32
    return %arg0, %c0_i32 : i32, i32
  }
}

</mosaic_0001>

<llo_original>
// kernel: tpu_custom_call.1
$region0: #{tpu_custom_call.1}
  #allocation0 [shape = 'u32[]', space=smem, size = 0x4, offset = 0x4, fixed_abs, tag = 'smem constant byte address 0x4 - core index']
  #allocation1 [shape = 'u32[72,128]{1,0:T(1,128)}', space=vmem, size = 0x9000, scoped, tag = 'internal scratch']
  %s0 = inlined_call_operand.hbm [shape: f32[16,128], index: 0, kind: input, shape index: {}]
  %s1 = inlined_call_operand.hbm [shape: f32[16,128], index: 1, kind: input, shape index: {}]
  %s2 = inlined_call_operand.hbm [shape: f32[8,128], index: 2, kind: output, shape index: {}]
  %s3 = sld [smem:[#allocation0]]
  $region30: #{tpu_custom_call.1} parent=0
    _
  %s5 = ssub.s32 1, %s3
  %s6 = scalar_select 0, %s5, %s3
  $region1: #{tpu_custom_call.1} parent=0
    #allocation2 [shape = 'u8[8192]{0}', space=vmem, size = 0x2000, scoped, tag = 'input window, operand 0, single buffered']
    #allocation3 [shape = 's32[1]{0}', space=sflag, size = 0x4, scoped, tag = 'scoped memory for tpu_custom_call.1']
    #allocation4 [shape = 's32[1]{0}', space=sflag, size = 0x4, scoped, tag = 'scoped memory for tpu_custom_call.1']
    #allocation5 [shape = 'u8[8192]{0}', space=vmem, size = 0x2000, scoped, tag = 'input window, operand 1, single buffered']
    #allocation6 [shape = 's32[1]{0}', space=sflag, size = 0x4, scoped, tag = 'scoped memory for tpu_custom_call.1']
    #allocation7 [shape = 'u8[4096]{0}', space=vmem, size = 0x1000, scoped, tag = 'output window, operand 0, single buffered']
    %7 = vsyncpa [#allocation3], 0
    %8 = vsyncpa [#allocation6], 0
    %9 = vsyncpa [#allocation4], 0
    // Predicated region
    $region2: #{tpu_custom_call.1} parent=1 // pred_check
      _
    $region3: #{tpu_custom_call.1} parent=1 // pred_check_branch
      %11 = sbr.rel (0) target = $region5
    $region4: #{tpu_custom_call.1} parent=1 // pred_region
      %s12 = sadd.s32 0, 0
      %p13 = scmp.lt.s32.totalorder %s12, 0
      %s14 = scalar_select %p13, %s12, 0
      %s15 = smul.u32 2, %s14
      %17 = vsyncadd [#allocation3], 0
      %s18 = smul.addr %s15, 8
      %s19 = scalar_lea.hbm %s0, %s18
      %s20 = sshll.u32 %s19, 4
      %s21 = int_to_ptr.hbm [resolvable:$true] %s20
      %s22 = sshll.u32 [#allocation2], 4
      %s23 = int_to_ptr.vmem [resolvable:$true] %s22
      %28 = dma.hbm_to_vmem [thread:$0]  %s21, 256, %s23, [#allocation3], 128, 128, 8
    $region5: #{tpu_custom_call.1} parent=1 // pred_fallthru
      _
    // Predicated region
    $region6: #{tpu_custom_call.1} parent=1 // pred_check
      _
    $region7: #{tpu_custom_call.1} parent=1 // pred_check_branch
      %30 = sbr.rel (0) target = $region9
    $region8: #{tpu_custom_call.1} parent=1 // pred_region
      %s31 = sadd.s32 0, 0
      %p32 = scmp.lt.s32.totalorder %s31, 0
      %s33 = scalar_select %p32, %s31, 0
      %s34 = smul.u32 2, %s33
      %36 = vsyncadd [#allocation6], 0
      %s37 = smul.addr %s34, 8
      %s38 = scalar_lea.hbm %s1, %s37
      %s39 = sshll.u32 %s38, 4
      %s40 = int_to_ptr.hbm [resolvable:$true] %s39
      %s41 = sshll.u32 [#allocation5], 4
      %s42 = int_to_ptr.vmem [resolvable:$true] %s41
      %47 = dma.hbm_to_vmem [thread:$0]  %s40, 256, %s42, [#allocation6], 128, 128, 8
    $region9: #{tpu_custom_call.1} parent=1 // pred_fallthru
      _
    // Predicated region
    $region10: #{tpu_custom_call.1} parent=1 // pred_check
      _
    $region11: #{tpu_custom_call.1} parent=1 // pred_check_branch
      %49 = sbr.rel (0) target = $region13
    $region12: #{tpu_custom_call.1} parent=1 // pred_region
      %51 = dma.done [#allocation3], 256
    $region13: #{tpu_custom_call.1} parent=1 // pred_fallthru
      _
    // Predicated region
    $region14: #{tpu_custom_call.1} parent=1 // pred_check
      _
    $region15: #{tpu_custom_call.1} parent=1 // pred_check_branch
      %53 = sbr.rel (0) target = $region17
    $region16: #{tpu_custom_call.1} parent=1 // pred_region
      %55 = dma.done [#allocation6], 256
    $region17: #{tpu_custom_call.1} parent=1 // pred_fallthru
      _
    %s56 = sadd.s32 0, 0
    %p57 = scmp.lt.s32.totalorder %s56, 0
    %s58 = scalar_select %p57, %s56, 0
    %s59 = smul.u32 2, %s58
    %s60 = sadd.s32 0, 0
    %p61 = scmp.lt.s32.totalorder %s60, 0
    %s62 = scalar_select %p61, %s60, 0
    %s63 = smul.u32 2, %s62
    %p64 = scmp.eq.s32.totalorder 0, 0
    // Predicated region
    $region18: #{tpu_custom_call.1} parent=1 // pred_check
      %p65 = pneg %p64
    $region19: #{tpu_custom_call.1} parent=1 // pred_check_branch
      %67 = sbr.rel (%p65) target = $region21
    $region20: #{tpu_custom_call.1} parent=1 // pred_region
      %68 = vst [vmem:[#allocation7] sm:$0xff] 0.0
    $region21: #{tpu_custom_call.1} parent=1 // pred_fallthru
      _
    %v69 = vld [vmem:[#allocation7] sm:$0xff]
    %v70 = vld [vmem:[#allocation2] sm:$0xff]
    %v71 = vld [vmem:[#allocation2 + $0x8] sm:$0xff]
    %v72 = vld [vmem:[#allocation5] sm:$0xff]
    %v73 = vld [vmem:[#allocation5 + $0x8] sm:$0xff]
    %v74 = vlog2.pop %v70
    %v75 = vmul.f32 %v74, 0.6931472
    %v76 = vlog2.pop %v71
    %v77 = vmul.f32 %v76, 0.6931472
    %v78 = vmax.f32 %v75, -100.0
    %v79 = vmax.f32 %v77, -100.0
    %v80 = vsub.f32 1.0, %v70
    %v81 = vsub.f32 1.0, %v71
    %v82 = vlog2.pop %v80
    %v83 = vmul.f32 %v82, 0.6931472
    %v84 = vlog2.pop %v81
    %v85 = vmul.f32 %v84, 0.6931472
    %v86 = vmax.f32 %v83, -100.0
    %v87 = vmax.f32 %v85, -100.0
    %v88 = vmul.f32 %v72, %v78
    %v89 = vmul.f32 %v73, %v79
    %v90 = vsub.f32 1.0, %v72
    %v91 = vsub.f32 1.0, %v73
    %v92 = vmul.f32 %v90, %v86
    %v93 = vmul.f32 %v91, %v87
    %v94 = vadd.f32 %v88, %v92
    %v95 = vadd.f32 %v89, %v93
    %v96 = vsub.f32 0.0, %v94
    %v97 = vsub.f32 0.0, %v95
    %v98 = vadd.f32 %v96, %v97
    %v99 = vadd.f32 %v69, %v98
    %100 = vst [vmem:[#allocation7] sm:$0xff] %v99
    // Predicated region
    $region22: #{tpu_custom_call.1} parent=1 // pred_check
      _
    $region23: #{tpu_custom_call.1} parent=1 // pred_check_branch
      %102 = sbr.rel (0) target = $region25
    $region24: #{tpu_custom_call.1} parent=1 // pred_region
      %104 = vsyncadd [#allocation4], 0
      %s106 = sshll.u32 [#allocation7], 4
      %s107 = int_to_ptr.vmem [resolvable:$true] %s106
      %s108 = sshll.u32 %s2, 4
      %s109 = int_to_ptr.hbm [resolvable:$true] %s108
      %111 = dma.vmem_to_hbm [thread:$0]  %s107, 128, %s109, [#allocation4]
    $region25: #{tpu_custom_call.1} parent=1 // pred_fallthru
      _
    // Predicated region
    $region26: #{tpu_custom_call.1} parent=1 // pred_check
      _
    $region27: #{tpu_custom_call.1} parent=1 // pred_check_branch
      %113 = sbr.rel (0) target = $region29
    $region28: #{tpu_custom_call.1} parent=1 // pred_region
      %115 = dma.done [#allocation4], 128
    $region29: #{tpu_custom_call.1} parent=1 // pred_fallthru
      _
    %116 = vsyncpa [#allocation3], 1
    %117 = vsyncpa [#allocation6], 1
    %118 = vsyncpa [#allocation4], 1

</llo_original>
